<compile_context>
chip_gen: v5e
topology: v5e:2x2
jax: 0.10.0
libtpu: 0.0.40
codegen_flags: <defaults>
</compile_context>

<pallas_src>
import functools

import jax
import jax.numpy as jnp
from jax.experimental import pallas as pl
from jax.experimental.pallas import tpu as pltpu

LANES = 128
DEFAULT_BLOCK_ROWS = 1024  # 1024x128 f32 = 512 KiB / block / input


def _mape_kernel(pred_ref, true_ref, out_ref, acc_ref, *, n_valid, block_rows):
    i = pl.program_id(0)

    @pl.when(i == 0)
    def _():
        acc_ref[...] = jnp.zeros_like(acc_ref)

    p = pred_ref[...].astype(jnp.float32)
    t = true_ref[...].astype(jnp.float32)
    err = jnp.abs((p - t) / t)

    # Mask everything past the true (unpadded) element count. The last grid
    # block may be partially out of bounds; whatever values live there are
    # selected away before the sum (jnp.where is a per-element select, so even
    # NaN/Inf garbage cannot leak through).
    base = i * (block_rows * LANES)
    row_ids = jax.lax.broadcasted_iota(jnp.int32, (block_rows, LANES), 0)
    lane_ids = jax.lax.broadcasted_iota(jnp.int32, (block_rows, LANES), 1)
    flat_ids = base + row_ids * LANES + lane_ids
    err = jnp.where(flat_ids < n_valid, err, jnp.float32(0.0))

    # Lane-parallel partial sums only in the steady state; full cross-lane
    # reduction is deferred to the epilogue below.
    acc_ref[...] += jnp.sum(err, axis=0, keepdims=True)

    @pl.when(i == pl.num_programs(0) - 1)
    def _():
        total = jnp.sum(acc_ref[...])
        scale = jnp.float32(100.0 / n_valid)
        out_ref[...] = (total * scale).reshape(1, 1).astype(out_ref.dtype)


def mape_loss(pred, true):
    """Pallas TPU implementation of MAPELoss.forward(pred, true)."""
    assert pred.shape == true.shape, "pred/true must have identical shapes"
    n = pred.size
    assert n > 0, "empty input"

    pred_flat = pred.reshape(-1)
    true_flat = true.reshape(-1)

    # Only pad when the size is not lane-aligned (at most 127 elements, with a
    # neutral value); for aligned sizes the 2-D reshape below is copy-free.
    padded = pl.cdiv(n, LANES) * LANES
    if padded != n:
        pad = padded - n
        pred_flat = jnp.pad(pred_flat, (0, pad), constant_values=1)
        true_flat = jnp.pad(true_flat, (0, pad), constant_values=1)

    rows = padded // LANES
    pred2d = pred_flat.reshape(rows, LANES)
    true2d = true_flat.reshape(rows, LANES)

    # Big blocks for bandwidth; full-array block for small inputs. block_rows
    # is either a multiple of 8 (DEFAULT_BLOCK_ROWS) or equals the full row
    # count, so the (8, 128) BlockSpec constraint is always satisfied.
    block_rows = min(DEFAULT_BLOCK_ROWS, rows)
    grid = (pl.cdiv(rows, block_rows),)

    out = pl.pallas_call(
        functools.partial(_mape_kernel, n_valid=n, block_rows=block_rows),
        out_shape=jax.ShapeDtypeStruct((1, 1), jnp.float32),
        grid_spec=pltpu.PrefetchScalarGridSpec(
            num_scalar_prefetch=0,
            grid=grid,
            in_specs=[
                pl.BlockSpec((block_rows, LANES), lambda i: (i, 0)),
                pl.BlockSpec((block_rows, LANES), lambda i: (i, 0)),
            ],
            out_specs=pl.BlockSpec((1, 1), lambda i: (0, 0)),
            scratch_shapes=[pltpu.VMEM((1, LANES), jnp.float32)],
        ),
        compiler_params=pltpu.CompilerParams(
            dimension_semantics=("arbitrary",),  # reduction axis
        ),
    )(pred2d, true2d)

    return out[0, 0]  # scalar, like torch.mean(...) * 100


def _ref(pred, true):
    return jnp.mean(jnp.abs((pred - true) / true)) * 100.0


if __name__ == "__main__":
    key = jax.random.PRNGKey(0)

    # Main case: small NCHW-ish shapes (batch=2, channels=4, spatial=16x16).
    k1, k2, k3, k4, k5, k6 = jax.random.split(key, 6)
    shape = (2, 4, 16, 16)
    pred = jax.random.normal(k1, shape, dtype=jnp.float32)
    # Keep `true` away from zero (same implicit assumption as the torch module).
    true = jax.random.uniform(k2, shape, dtype=jnp.float32, minval=0.5, maxval=2.0)

    loss = mape_loss(pred, true)
    jax.block_until_ready(loss)
    ref = _ref(pred, true)
    assert jnp.allclose(loss, ref, rtol=1e-5, atol=1e-5), (loss, ref)

    # Non-lane-aligned size: exercises the tail pad + in-kernel mask path.
    shape2 = (3, 5, 7)  # 105 elements
    pred2 = jax.random.normal(k3, shape2, dtype=jnp.float32)
    true2 = jax.random.uniform(k4, shape2, dtype=jnp.float32, minval=0.5, maxval=2.0)
    loss2 = mape_loss(pred2, true2)
    jax.block_until_ready(loss2)
    assert jnp.allclose(loss2, _ref(pred2, true2), rtol=1e-5, atol=1e-5)

    # Multi-block case: 2048 rows -> grid of 2 blocks of 1024 rows each.
    shape3 = (2, 8, 128, 128)
    pred3 = jax.random.normal(k5, shape3, dtype=jnp.float32)
    true3 = jax.random.uniform(k6, shape3, dtype=jnp.float32, minval=0.5, maxval=2.0)
    loss3 = mape_loss(pred3, true3)
    jax.block_until_ready(loss3)
    assert jnp.allclose(loss3, _ref(pred3, true3), rtol=1e-5, atol=1e-5)

    print("KERNEL_OK")
</pallas_src>

<mosaic_0001>
module attributes {stable_mosaic.version = 11 : i64} {
  func.func @_mape_kernel(%arg0: i32, %arg1: memref<16x128xf32, #tpu.memory_space<vmem>>, %arg2: memref<16x128xf32, #tpu.memory_space<vmem>>, %arg3: memref<1x1xf32, #tpu.memory_space<vmem>>, %arg4: memref<1x128xf32, #tpu.memory_space<vmem>>) attributes {dimension_semantics = [#tpu.dimension_semantics<arbitrary>], iteration_bounds = array<i64: 1>, scalar_prefetch = 0 : i64, scratch_operands = 1 : i64, tpu.core_type = #tpu.core_type<tc>, window_params = [{transform_indices = @transform_0, window_bounds = array<i64: 16, 128>}, {transform_indices = @transform_1, window_bounds = array<i64: 16, 128>}, {pipeline_mode = #tpu.pipeline_mode<synchronous>, transform_indices = @transform_2, window_bounds = array<i64: 1, 1>}]} {
    %c0_i32 = arith.constant 0 : i32
    %0 = arith.cmpi eq, %arg0, %c0_i32 : i32
    %1 = arith.extui %0 : i1 to i32
    %c0_i32_0 = arith.constant 0 : i32
    %2 = arith.cmpi ne, %1, %c0_i32_0 : i32
    scf.if %2 {
      %cst_12 = arith.constant 0.000000e+00 : f32
      %28 = vector.broadcast %cst_12 : f32 to vector<1x128xf32>
      %c0_13 = arith.constant 0 : index
      %c0_14 = arith.constant 0 : index
      %29 = vector.load %arg4[%c0_13, %c0_14] : memref<1x128xf32, #tpu.memory_space<vmem>>, vector<1x128xf32>
      tpu.vector_store %arg4[%c0_13, %c0_14], %28 {strides = array<i32>} : memref<1x128xf32, #tpu.memory_space<vmem>>, vector<1x128xf32>,
    } else {
    }
    %c0 = arith.constant 0 : index
    %c0_1 = arith.constant 0 : index
    %3 = vector.load %arg1[%c0, %c0_1] : memref<16x128xf32, #tpu.memory_space<vmem>>, vector<16x128xf32>
    %c0_2 = arith.constant 0 : index
    %c0_3 = arith.constant 0 : index
    %4 = vector.load %arg2[%c0_2, %c0_3] : memref<16x128xf32, #tpu.memory_space<vmem>>, vector<16x128xf32>
    %5 = arith.subf %3, %4 : vector<16x128xf32>
    %6 = arith.divf %5, %4 : vector<16x128xf32>
    %7 = math.absf %6 : vector<16x128xf32>
    %c2048_i32 = arith.constant 2048 : i32
    %8 = arith.muli %arg0, %c2048_i32 : i32
    %9 = tpu.iota {dimensions = array<i32: 0>} : vector<16x128xi32>
    %10 = tpu.iota {dimensions = array<i32: 1>} : vector<16x128xi32>
    %c128_i32 = arith.constant 128 : i32
    %11 = vector.broadcast %c128_i32 : i32 to vector<16x128xi32>
    %12 = arith.muli %9, %11 : vector<16x128xi32>
    %13 = vector.broadcast %8 : i32 to vector<16x128xi32>
    %14 = arith.addi %13, %12 : vector<16x128xi32>
    %15 = arith.addi %14, %10 : vector<16x128xi32>
    %c2048_i32_4 = arith.constant 2048 : i32
    %16 = vector.broadcast %c2048_i32_4 : i32 to vector<16x128xi32>
    %17 = arith.cmpi slt, %15, %16 : vector<16x128xi32>
    %cst = arith.constant 0.000000e+00 : f32
    %18 = vector.broadcast %cst : f32 to vector<16x128xf32>
    %19 = arith.select %17, %7, %18 : vector<16x128xi1>, vector<16x128xf32>
    %c0_5 = arith.constant 0 : index
    %c0_6 = arith.constant 0 : index
    %20 = vector.load %arg4[%c0_5, %c0_6] : memref<1x128xf32, #tpu.memory_space<vmem>>, vector<1x128xf32>
    %cst_7 = arith.constant dense<0.000000e+00> : vector<128xf32>
    %21 = vector.multi_reduction <add>, %19, %cst_7 [0] : vector<16x128xf32> to vector<128xf32>
    %22 = vector.shape_cast %21 : vector<128xf32> to vector<1x128xf32>
    %23 = arith.addf %20, %22 : vector<1x128xf32>
    %c0_8 = arith.constant 0 : index
    %c0_9 = arith.constant 0 : index
    %24 = vector.load %arg4[%c0_8, %c0_9] : memref<1x128xf32, #tpu.memory_space<vmem>>, vector<1x128xf32>
    tpu.vector_store %arg4[%c0_8, %c0_9], %23 {strides = array<i32>} : memref<1x128xf32, #tpu.memory_space<vmem>>, vector<1x128xf32>,
    %c0_i32_10 = arith.constant 0 : i32
    %25 = arith.cmpi eq, %arg0, %c0_i32_10 : i32
    %26 = arith.extui %25 : i1 to i32
    %c0_i32_11 = arith.constant 0 : i32
    %27 = arith.cmpi ne, %26, %c0_i32_11 : i32
    scf.if %27 {
      %c0_12 = arith.constant 0 : index
      %c0_13 = arith.constant 0 : index
      %28 = vector.load %arg4[%c0_12, %c0_13] : memref<1x128xf32, #tpu.memory_space<vmem>>, vector<1x128xf32>
      %29 = vector.shape_cast %28 : vector<1x128xf32> to vector<1x1x128xf32>
      %cst_14 = arith.constant dense<0.000000e+00> : vector<1xf32>
      %30 = vector.multi_reduction <add>, %29, %cst_14 [1, 2] : vector<1x1x128xf32> to vector<1xf32>
      %31 = vector.shape_cast %30 : vector<1xf32> to vector<1x1x1xf32>
      %32 = vector.extract %31[0, 0, 0] : f32 from vector<1x1x1xf32>
      %cst_15 = arith.constant 0.048828125 : f32
      %33 = arith.mulf %32, %cst_15 : f32
      %34 = vector.broadcast %33 : f32 to vector<1x1xf32>
      %c0_16 = arith.constant 0 : index
      %c0_17 = arith.constant 0 : index
      %35 = vector.load %arg3[%c0_16, %c0_17] : memref<1x1xf32, #tpu.memory_space<vmem>>, vector<1x1xf32>
      tpu.vector_store %arg3[%c0_16, %c0_17], %34 {strides = array<i32>} : memref<1x1xf32, #tpu.memory_space<vmem>>, vector<1x1xf32>,
    } else {
    }
    return
  }
  func.func @transform_0(%arg0: i32) -> (i32, i32) {
    %c0_i32 = arith.constant 0 : i32
    %c0_i32_0 = arith.constant 0 : i32
    return %arg0, %c0_i32 : i32, i32
  }
  func.func @transform_1(%arg0: i32) -> (i32, i32) {
    %c0_i32 = arith.constant 0 : i32
    %c0_i32_0 = arith.constant 0 : i32
    return %arg0, %c0_i32 : i32, i32
  }
  func.func @transform_2(%arg0: i32) -> (i32, i32) {
    %c0_i32 = arith.constant 0 : i32
    %c0_i32_0 = arith.constant 0 : i32
    %c0_i32_1 = arith.constant 0 : i32
    return %c0_i32, %c0_i32_0 : i32, i32
  }
}

</mosaic_0001>

<llo_original>
// kernel: tpu_custom_call.1
$region0: #{tpu_custom_call.1}
  #allocation0 [shape = 'u32[]', space=smem, size = 0x4, offset = 0x4, fixed_abs, tag = 'smem constant byte address 0x4 - core index']
  #allocation1 [shape = 'u32[72,128]{1,0:T(1,128)}', space=vmem, size = 0x9000, scoped, tag = 'internal scratch']
  #allocation2 [shape = 'f32[1,128]{1,0:T(1,128)}', space=vmem, size = 0x200, scoped, tag = 'scratch operand']
  %s0 = inlined_call_operand.hbm [shape: f32[16,128], index: 0, kind: input, shape index: {}]
  %s1 = inlined_call_operand.hbm [shape: f32[16,128], index: 1, kind: input, shape index: {}]
  %s2 = inlined_call_operand.hbm [shape: f32[1,1], index: 2, kind: output, shape index: {}]
  %s3 = sld [smem:[#allocation0]]
  $region34: #{tpu_custom_call.1} parent=0
    _
  %s5 = ssub.s32 1, %s3
  %s6 = scalar_select 0, %s5, %s3
  $region1: #{tpu_custom_call.1} parent=0
    #allocation3 [shape = 'u8[8192]{0}', space=vmem, size = 0x2000, scoped, tag = 'input window, operand 0, single buffered']
    #allocation4 [shape = 's32[1]{0}', space=sflag, size = 0x4, scoped, tag = 'scoped memory for tpu_custom_call.1']
    #allocation5 [shape = 's32[1]{0}', space=sflag, size = 0x4, scoped, tag = 'scoped memory for tpu_custom_call.1']
    #allocation6 [shape = 'u8[8192]{0}', space=vmem, size = 0x2000, scoped, tag = 'input window, operand 1, single buffered']
    #allocation7 [shape = 's32[1]{0}', space=sflag, size = 0x4, scoped, tag = 'scoped memory for tpu_custom_call.1']
    #allocation8 [shape = 'u8[512]{0}', space=vmem, size = 0x400, scoped, tag = 'output window, operand 0, single buffered']
    %7 = vsyncpa [#allocation4], 0
    %8 = vsyncpa [#allocation7], 0
    %9 = vsyncpa [#allocation5], 0
    // Predicated region
    $region2: #{tpu_custom_call.1} parent=1 // pred_check
      _
    $region3: #{tpu_custom_call.1} parent=1 // pred_check_branch
      %11 = sbr.rel (0) target = $region5
    $region4: #{tpu_custom_call.1} parent=1 // pred_region
      %13 = vsyncadd [#allocation4], 0
      %s14 = sshll.u32 %s0, 4
      %s15 = int_to_ptr.hbm [resolvable:$true] %s14
      %s16 = sshll.u32 [#allocation3], 4
      %s17 = int_to_ptr.vmem [resolvable:$true] %s16
      %22 = dma.hbm_to_vmem [thread:$0]  %s15, 256, %s17, [#allocation4], 128, 128, 8
    $region5: #{tpu_custom_call.1} parent=1 // pred_fallthru
      _
    // Predicated region
    $region6: #{tpu_custom_call.1} parent=1 // pred_check
      _
    $region7: #{tpu_custom_call.1} parent=1 // pred_check_branch
      %24 = sbr.rel (0) target = $region9
    $region8: #{tpu_custom_call.1} parent=1 // pred_region
      %26 = vsyncadd [#allocation7], 0
      %s27 = sshll.u32 %s1, 4
      %s28 = int_to_ptr.hbm [resolvable:$true] %s27
      %s29 = sshll.u32 [#allocation6], 4
      %s30 = int_to_ptr.vmem [resolvable:$true] %s29
      %35 = dma.hbm_to_vmem [thread:$0]  %s28, 256, %s30, [#allocation7], 128, 128, 8
    $region9: #{tpu_custom_call.1} parent=1 // pred_fallthru
      _
    // Predicated region
    $region10: #{tpu_custom_call.1} parent=1 // pred_check
      _
    $region11: #{tpu_custom_call.1} parent=1 // pred_check_branch
      %37 = sbr.rel (0) target = $region13
    $region12: #{tpu_custom_call.1} parent=1 // pred_region
      %39 = dma.done [#allocation4], 256
    $region13: #{tpu_custom_call.1} parent=1 // pred_fallthru
      _
    // Predicated region
    $region14: #{tpu_custom_call.1} parent=1 // pred_check
      _
    $region15: #{tpu_custom_call.1} parent=1 // pred_check_branch
      %41 = sbr.rel (0) target = $region17
    $region16: #{tpu_custom_call.1} parent=1 // pred_region
      %43 = dma.done [#allocation7], 256
    $region17: #{tpu_custom_call.1} parent=1 // pred_fallthru
      _
    %p44 = scmp.eq.s32.totalorder 0, 0
    // Predicated region
    $region18: #{tpu_custom_call.1} parent=1 // pred_check
      %p45 = pneg %p44
    $region19: #{tpu_custom_call.1} parent=1 // pred_check_branch
      %47 = sbr.rel (%p45) target = $region21
    $region20: #{tpu_custom_call.1} parent=1 // pred_region
      %48 = vst [vmem:[#allocation2] sm:$0x1] 0.0
    $region21: #{tpu_custom_call.1} parent=1 // pred_fallthru
      _
    %v49 = vld [vmem:[#allocation3] sm:$0xff]
    %v50 = vld [vmem:[#allocation3 + $0x8] sm:$0xff]
    %v51 = vld [vmem:[#allocation6] sm:$0xff]
    %v52 = vld [vmem:[#allocation6 + $0x8] sm:$0xff]
    %v53 = vsub.f32 %v49, %v51
    %v54 = vsub.f32 %v50, %v52
    %v55 = vrcp.pop %v51
    %v56 = vmul.f32 %v51, %v55
    %v57 = vsub.f32 1.0, %v56
    %v58 = vmul.f32 %v55, %v57
    %v59 = vadd.f32 %v55, %v58
    %vm60 = vweird.f32 %v51
    %vm61 = vweird.f32 %v55
    %vm62 = vmor %vm60, %vm61
    %v63 = vsel %vm62, %v55, %v59
    %v64 = vand.u32 2147483647, %v51
    %vm65 = vcmp.eq.f32.partialorder %v64, 8.507059e+37
    %v66 = vand.u32 %v51, 2147483648
    %v67 = vor.u32 1.1754944e-38, %v66
    %v68 = vsel %vm65, %v67, %v63
    %v69 = vmul.f32 %v53, %v68
    %v70 = vrcp.pop %v52
    %v71 = vmul.f32 %v52, %v70
    %v72 = vsub.f32 1.0, %v71
    %v73 = vmul.f32 %v70, %v72
    %v74 = vadd.f32 %v70, %v73
    %vm75 = vweird.f32 %v52
    %vm76 = vweird.f32 %v70
    %vm77 = vmor %vm75, %vm76
    %v78 = vsel %vm77, %v70, %v74
    %v79 = vand.u32 2147483647, %v52
    %vm80 = vcmp.eq.f32.partialorder %v79, 8.507059e+37
    %v81 = vand.u32 %v52, 2147483648
    %v82 = vor.u32 1.1754944e-38, %v81
    %v83 = vsel %vm80, %v82, %v78
    %v84 = vmul.f32 %v54, %v83
    %v85 = vand.u32 2147483647, %v69
    %v86 = vand.u32 2147483647, %v84
    %s87 = smul.u32 0, 2048
    %v88 = vlaneseq
    %v89 = vshrl.u32 %v88, 7
    %v90 = vadd.s32 %v89, 8
    %v91 = vlaneseq
    %v92 = vand.u32 %v91, 127
    %v93 = vmul.u32 %v89, 128
    %v94 = vmul.u32 %v90, 128
    %v95 = vstv %s87
    %v96 = vadd.s32 %v95, %v93
    %v97 = vadd.s32 %v95, %v94
    %v98 = vadd.s32 %v96, %v92
    %v99 = vadd.s32 %v97, %v92
    %vm100 = vcmp.lt.s32.totalorder %v98, 2048
    %vm101 = vcmp.lt.s32.totalorder %v99, 2048
    %v102 = vsel %vm100, %v85, 0.0
    %v103 = vsel %vm101, %v86, 0.0
    %v104 = vld [vmem:[#allocation2] sm:$0x1]
    %v105 = vadd.f32 %v102, %v103
    %v106 = vrot.slane %v105, 4
    %v107 = vadd.f32 %v105, %v106
    %v108 = vrot.slane %v107, 2
    %v109 = vadd.f32 %v107, %v108
    %v110 = vrot.slane %v109, 1
    %v111 = vadd.f32 %v109, %v110
    %v112 = vadd.f32 %v104, %v111
    %113 = vst [vmem:[#allocation2] sm:$0x1] %v112
    // Predicated region
    $region22: #{tpu_custom_call.1} parent=1 // pred_check
      %p114 = pneg %p44
    $region23: #{tpu_custom_call.1} parent=1 // pred_check_branch
      %116 = sbr.rel (%p114) target = $region25
    $region24: #{tpu_custom_call.1} parent=1 // pred_region
      %v117 = vld [vmem:[#allocation2] sm:$0x1]
      %vm118 = vcmask 1040384
      %v119 = vsel %vm118, %v117, 0.0
      %120 = vadd.xlane.f32.xlu0 %v119
      %v121 = vpop.xlane.xlu0 %120
      %v122 = vrot.slane %v121, 4
      %v123 = vadd.f32 %v121, %v122
      %v124 = vrot.slane %v123, 2
      %v125 = vadd.f32 %v123, %v124
      %v126 = vrot.slane %v125, 1
      %v127 = vadd.f32 %v125, %v126
      %s128 = vtos %v127
      %s129 = smul.f32 %s128, 0.048828125
      %v130 = vstv %s129
      %vm131 = vcmask 0
      %132 = vst.msk [vmem:[#allocation8] sm:$0x1] %vm131, %v130
    $region25: #{tpu_custom_call.1} parent=1 // pred_fallthru
      _
    // Predicated region
    $region26: #{tpu_custom_call.1} parent=1 // pred_check
      _
    $region27: #{tpu_custom_call.1} parent=1 // pred_check_branch
      %134 = sbr.rel (0) target = $region29
    $region28: #{tpu_custom_call.1} parent=1 // pred_region
      %136 = vsyncadd [#allocation5], 0
      %s138 = sshll.u32 [#allocation8], 4
      %s139 = int_to_ptr.vmem [resolvable:$true] %s138
      %s140 = sshll.u32 %s2, 4
      %s141 = int_to_ptr.hbm [resolvable:$true] %s140
      %143 = dma.vmem_to_hbm [thread:$0]  %s139, 16, %s141, [#allocation5]
    $region29: #{tpu_custom_call.1} parent=1 // pred_fallthru
      _
    // Predicated region
    $region30: #{tpu_custom_call.1} parent=1 // pred_check
      _
    $region31: #{tpu_custom_call.1} parent=1 // pred_check_branch
      %145 = sbr.rel (0) target = $region33
    $region32: #{tpu_custom_call.1} parent=1 // pred_region
      %147 = dma.done [#allocation5], 16
    $region33: #{tpu_custom_call.1} parent=1 // pred_fallthru
      _
    %148 = vsyncpa [#allocation4], 1
    %149 = vsyncpa [#allocation7], 1
    %150 = vsyncpa [#allocation5], 1

</llo_original>
